<compile_context>
chip_gen: v7x
topology: tpu7x:2x2x1
jax: 0.10.0
libtpu: 0.0.40
codegen_flags: <defaults>
</compile_context>

<pallas_src>
import jax
import jax.numpy as jnp
from jax.experimental import pallas as pl
from jax.experimental.pallas import tpu as pltpu

BN_EPS = 1e-5


def _linear_bn_relu_kernel(x_ref, w_ref, gamma_ref, beta_ref, o_ref, acc_ref):
    # x: (N, TK) f32, w: (TK, TN) bf16/f32, gamma/beta: (1, TN) f32, o: (N, TN), acc: (N, TN) f32
    k = pl.program_id(1)

    @pl.when(k == 0)
    def _():
        acc_ref[...] = jnp.zeros_like(acc_ref)

    acc_ref[...] += jnp.dot(
        x_ref[...].astype(w_ref.dtype), w_ref[...],
        preferred_element_type=jnp.float32)

    @pl.when(k == pl.num_programs(1) - 1)
    def _():
        y = acc_ref[...]
        # BatchNorm1d (training-mode batch stats), single reduction pass for mean & E[y^2].
        mean = jnp.mean(y, axis=0, keepdims=True)                 # (1, TN)
        mean_sq = jnp.mean(y * y, axis=0, keepdims=True)          # (1, TN)
        var = jnp.maximum(mean_sq - mean * mean, 0.0)             # biased variance, clamped
        scale = gamma_ref[...] * jax.lax.rsqrt(var + BN_EPS)      # (1, TN)
        shift = beta_ref[...] - mean * scale                      # (1, TN)
        # Note: the Linear bias is omitted here on purpose — it cancels in (y - mean).
        o_ref[...] = jnp.maximum(y * scale + shift, 0.0).astype(o_ref.dtype)


def _linear_relu_kernel(x_ref, w_ref, b_ref, o_ref, acc_ref):
    k = pl.program_id(1)

    @pl.when(k == 0)
    def _():
        acc_ref[...] = jnp.zeros_like(acc_ref)

    acc_ref[...] += jnp.dot(
        x_ref[...].astype(w_ref.dtype), w_ref[...],
        preferred_element_type=jnp.float32)

    @pl.when(k == pl.num_programs(1) - 1)
    def _():
        o_ref[...] = jnp.maximum(acc_ref[...] + b_ref[...], 0.0).astype(o_ref.dtype)


def prepare_linear_block_params(weight, bias, gamma, beta, *, compute_dtype=jnp.bfloat16):
    """One-time parameter prep (do NOT call per forward): transpose weight from the PyTorch
    (C_out, C_in) layout to (C_in, C_out) and cast to the MXU compute dtype."""
    w_t = jnp.asarray(weight).T.astype(compute_dtype)            # (C_in, C_out)
    c_out = w_t.shape[1]
    return {
        "w_t": w_t,
        "bias": jnp.asarray(bias, jnp.float32).reshape(1, c_out),
        "gamma": jnp.asarray(gamma, jnp.float32).reshape(1, c_out),
        "beta": jnp.asarray(beta, jnp.float32).reshape(1, c_out),
    }


def linear_block(x, params, *, use_bn=True, tile_n=256, tile_k=512, out_dtype=None):
    """Pallas implementation of LinearBlock.forward.

    x:      (N, C_in) float32
    params: dict from prepare_linear_block_params (weight pre-transposed / pre-cast).
    """
    w_t = params["w_t"]
    n, c_in = x.shape
    c_in_w, c_out = w_t.shape
    assert c_in == c_in_w, "weight / input feature mismatch"
    out_dtype = x.dtype if out_dtype is None else out_dtype

    tile_n = min(tile_n, c_out)
    tile_k = min(tile_k, c_in)
    assert c_out % tile_n == 0, "out_dim must be a multiple of the feature tile"
    assert c_in % tile_k == 0, "in_dim must be a multiple of the K tile"

    # Grid: (feature tiles [parallel], K tiles [arbitrary, reduction axis last]).
    grid = (c_out // tile_n, c_in // tile_k)

    x_spec = pl.BlockSpec((n, tile_k), lambda j, k: (0, k))
    w_spec = pl.BlockSpec((tile_k, tile_n), lambda j, k: (k, j))
    vec_spec = pl.BlockSpec((1, tile_n), lambda j, k: (0, j))
    out_spec = pl.BlockSpec((n, tile_n), lambda j, k: (0, j))

    # Rough VMEM budget (double-buffered inputs/outputs + f32 accumulator) with headroom,
    # capped at 64 MiB so the same config is valid on v7x physical VMEM.
    isz = lambda dt: jnp.dtype(dt).itemsize
    n_vecs = 2 if use_bn else 1
    est = 2 * (n * tile_k * isz(x.dtype)
               + tile_k * tile_n * isz(w_t.dtype)
               + n_vecs * tile_n * 4
               + n * tile_n * isz(out_dtype))
    est += n * tile_n * 4
    vmem_limit = int(min(max(2 * est, 32 * 1024 * 1024), 64 * 1024 * 1024))

    compiler_params = pltpu.CompilerParams(
        dimension_semantics=("parallel", "arbitrary"),
        vmem_limit_bytes=vmem_limit,
    )

    if use_bn:
        kernel = _linear_bn_relu_kernel
        inputs = (x, w_t, params["gamma"], params["beta"])
        in_specs = [x_spec, w_spec, vec_spec, vec_spec]
    else:
        kernel = _linear_relu_kernel
        inputs = (x, w_t, params["bias"])
        in_specs = [x_spec, w_spec, vec_spec]

    return pl.pallas_call(
        kernel,
        out_shape=jax.ShapeDtypeStruct((n, c_out), out_dtype),
        grid_spec=pltpu.PrefetchScalarGridSpec(
            num_scalar_prefetch=0,
            grid=grid,
            in_specs=in_specs,
            out_specs=out_spec,
            scratch_shapes=[pltpu.VMEM((n, tile_n), jnp.float32)],
        ),
        compiler_params=compiler_params,
    )(*inputs)


def _reference(x, weight, bias, gamma, beta, *, use_bn=True, compute_dtype=jnp.bfloat16):
    # Mirrors the PyTorch module (Linear incl. bias -> BN(train stats) -> ReLU), with the
    # same bf16 matmul / f32 accumulation as the kernel.
    y = jnp.dot(x.astype(compute_dtype), weight.T.astype(compute_dtype),
                preferred_element_type=jnp.float32) + bias
    if use_bn:
        mean = jnp.mean(y, axis=0, keepdims=True)
        var = jnp.mean((y - mean) ** 2, axis=0, keepdims=True)
        y = (y - mean) / jnp.sqrt(var + BN_EPS) * gamma + beta
    return jnp.maximum(y, 0.0)


if __name__ == "__main__":
    key = jax.random.PRNGKey(0)
    k_x, k_w, k_b, k_g, k_be = jax.random.split(key, 5)

    # Small, TPU-tile-friendly shapes (N multiple of 16 for bf16 sublane packing).
    N, IN_DIM, OUT_DIM = 16, 64, 512

    x = jax.random.normal(k_x, (N, IN_DIM), dtype=jnp.float32)
    bound = 1.0 / (IN_DIM ** 0.5)
    weight = jax.random.uniform(k_w, (OUT_DIM, IN_DIM), jnp.float32, -bound, bound)
    bias = jax.random.uniform(k_b, (OUT_DIM,), jnp.float32, -bound, bound)
    gamma = 1.0 + 0.1 * jax.random.normal(k_g, (OUT_DIM,), dtype=jnp.float32)
    beta = 0.1 * jax.random.normal(k_be, (OUT_DIM,), dtype=jnp.float32)

    params = prepare_linear_block_params(weight, bias, gamma, beta,
                                         compute_dtype=jnp.bfloat16)

    out_bn = jax.block_until_ready(linear_block(x, params, use_bn=True))
    out_nobn = jax.block_until_ready(linear_block(x, params, use_bn=False))

    ref_bn = _reference(x, weight, bias, gamma, beta, use_bn=True)
    ref_nobn = _reference(x, weight, bias, gamma, beta, use_bn=False)

    assert out_bn.shape == (N, OUT_DIM) and out_nobn.shape == (N, OUT_DIM)
    assert jnp.allclose(out_bn, ref_bn, atol=1e-3, rtol=1e-3), "BN path mismatch vs reference"
    assert jnp.allclose(out_nobn, ref_nobn, atol=1e-3, rtol=1e-3), "no-BN path mismatch vs reference"

    print("KERNEL_OK")
</pallas_src>

<mosaic_0001>
module attributes {stable_mosaic.version = 11 : i64} {
  func.func @_linear_bn_relu_kernel(%arg0: i32, %arg1: i32, %arg2: memref<16x64xf32, #tpu.memory_space<vmem>>, %arg3: memref<64x256xbf16, #tpu.memory_space<vmem>>, %arg4: memref<1x256xf32, #tpu.memory_space<vmem>>, %arg5: memref<1x256xf32, #tpu.memory_space<vmem>>, %arg6: memref<16x256xf32, #tpu.memory_space<vmem>>, %arg7: memref<16x256xf32, #tpu.memory_space<vmem>>) attributes {dimension_semantics = [#tpu.dimension_semantics<parallel>, #tpu.dimension_semantics<arbitrary>], iteration_bounds = array<i64: 2, 1>, scalar_prefetch = 0 : i64, scratch_operands = 1 : i64, tpu.core_type = #tpu.core_type<tc>, window_params = [{transform_indices = @transform_0, window_bounds = array<i64: 16, 64>}, {transform_indices = @transform_1, window_bounds = array<i64: 64, 256>}, {transform_indices = @transform_2, window_bounds = array<i64: 1, 256>}, {transform_indices = @transform_3, window_bounds = array<i64: 1, 256>}, {transform_indices = @transform_4, window_bounds = array<i64: 16, 256>}]} {
    %c0_i32 = arith.constant 0 : i32
    %0 = arith.cmpi eq, %arg1, %c0_i32 : i32
    %1 = arith.extui %0 : i1 to i32
    %c0_i32_0 = arith.constant 0 : i32
    %2 = arith.cmpi ne, %1, %c0_i32_0 : i32
    scf.if %2 {
      %cst_10 = arith.constant 0.000000e+00 : f32
      %13 = vector.broadcast %cst_10 : f32 to vector<16x256xf32>
      %c0_11 = arith.constant 0 : index
      %c0_12 = arith.constant 0 : index
      %14 = vector.load %arg7[%c0_11, %c0_12] : memref<16x256xf32, #tpu.memory_space<vmem>>, vector<16x256xf32>
      tpu.vector_store %arg7[%c0_11, %c0_12], %13 {strides = array<i32>} : memref<16x256xf32, #tpu.memory_space<vmem>>, vector<16x256xf32>,
    } else {
    }
    %c0 = arith.constant 0 : index
    %c0_1 = arith.constant 0 : index
    %3 = vector.load %arg7[%c0, %c0_1] : memref<16x256xf32, #tpu.memory_space<vmem>>, vector<16x256xf32>
    %c0_2 = arith.constant 0 : index
    %c0_3 = arith.constant 0 : index
    %4 = vector.load %arg2[%c0_2, %c0_3] : memref<16x64xf32, #tpu.memory_space<vmem>>, vector<16x64xf32>
    %5 = arith.truncf %4 : vector<16x64xf32> to vector<16x64xbf16>
    %c0_4 = arith.constant 0 : index
    %c0_5 = arith.constant 0 : index
    %6 = vector.load %arg3[%c0_4, %c0_5] : memref<64x256xbf16, #tpu.memory_space<vmem>>, vector<64x256xbf16>
    %cst = arith.constant dense<0.000000e+00> : vector<16x256xf32>
    %7 = tpu.matmul %5, %6, %cst {dimension_numbers = #tpu.dot_dimension_numbers<[1], [0], [0], [1], [0, 0, 1, 1], [], []>} : vector<16x64xbf16>, vector<64x256xbf16>, vector<16x256xf32> -> vector<16x256xf32>
    %8 = arith.addf %3, %7 : vector<16x256xf32>
    %c0_6 = arith.constant 0 : index
    %c0_7 = arith.constant 0 : index
    %9 = vector.load %arg7[%c0_6, %c0_7] : memref<16x256xf32, #tpu.memory_space<vmem>>, vector<16x256xf32>
    tpu.vector_store %arg7[%c0_6, %c0_7], %8 {strides = array<i32>} : memref<16x256xf32, #tpu.memory_space<vmem>>, vector<16x256xf32>,
    %c0_i32_8 = arith.constant 0 : i32
    %10 = arith.cmpi eq, %arg1, %c0_i32_8 : i32
    %11 = arith.extui %10 : i1 to i32
    %c0_i32_9 = arith.constant 0 : i32
    %12 = arith.cmpi ne, %11, %c0_i32_9 : i32
    scf.if %12 {
      %c0_10 = arith.constant 0 : index
      %c0_11 = arith.constant 0 : index
      %13 = vector.load %arg7[%c0_10, %c0_11] : memref<16x256xf32, #tpu.memory_space<vmem>>, vector<16x256xf32>
      %cst_12 = arith.constant dense<0.000000e+00> : vector<256xf32>
      %14 = vector.multi_reduction <add>, %13, %cst_12 [0] : vector<16x256xf32> to vector<256xf32>
      %15 = vector.shape_cast %14 : vector<256xf32> to vector<1x256xf32>
      %cst_13 = arith.constant 1.600000e+01 : f32
      %16 = vector.broadcast %cst_13 : f32 to vector<1x256xf32>
      %17 = arith.divf %15, %16 : vector<1x256xf32>
      %18 = arith.mulf %13, %13 : vector<16x256xf32>
      %cst_14 = arith.constant dense<0.000000e+00> : vector<256xf32>
      %19 = vector.multi_reduction <add>, %18, %cst_14 [0] : vector<16x256xf32> to vector<256xf32>
      %20 = vector.shape_cast %19 : vector<256xf32> to vector<1x256xf32>
      %cst_15 = arith.constant 1.600000e+01 : f32
      %21 = vector.broadcast %cst_15 : f32 to vector<1x256xf32>
      %22 = arith.divf %20, %21 : vector<1x256xf32>
      %23 = arith.mulf %17, %17 : vector<1x256xf32>
      %24 = arith.subf %22, %23 : vector<1x256xf32>
      %cst_16 = arith.constant 0.000000e+00 : f32
      %25 = vector.broadcast %cst_16 : f32 to vector<1x256xf32>
      %26 = arith.maximumf %24, %25 : vector<1x256xf32>
      %c0_17 = arith.constant 0 : index
      %c0_18 = arith.constant 0 : index
      %27 = vector.load %arg4[%c0_17, %c0_18] : memref<1x256xf32, #tpu.memory_space<vmem>>, vector<1x256xf32>
      %cst_19 = arith.constant 9.99999974E-6 : f32
      %28 = vector.broadcast %cst_19 : f32 to vector<1x256xf32>
      %29 = arith.addf %26, %28 : vector<1x256xf32>
      %30 = math.rsqrt %29 : vector<1x256xf32>
      %31 = arith.mulf %27, %30 : vector<1x256xf32>
      %c0_20 = arith.constant 0 : index
      %c0_21 = arith.constant 0 : index
      %32 = vector.load %arg5[%c0_20, %c0_21] : memref<1x256xf32, #tpu.memory_space<vmem>>, vector<1x256xf32>
      %33 = arith.mulf %17, %31 : vector<1x256xf32>
      %34 = arith.subf %32, %33 : vector<1x256xf32>
      %35 = vector.broadcast %31 : vector<1x256xf32> to vector<16x256xf32>
      %36 = arith.mulf %13, %35 : vector<16x256xf32>
      %37 = vector.broadcast %34 : vector<1x256xf32> to vector<16x256xf32>
      %38 = arith.addf %36, %37 : vector<16x256xf32>
      %cst_22 = arith.constant 0.000000e+00 : f32
      %39 = vector.broadcast %cst_22 : f32 to vector<16x256xf32>
      %40 = arith.maximumf %38, %39 : vector<16x256xf32>
      %c0_23 = arith.constant 0 : index
      %c0_24 = arith.constant 0 : index
      %41 = vector.load %arg6[%c0_23, %c0_24] : memref<16x256xf32, #tpu.memory_space<vmem>>, vector<16x256xf32>
      tpu.vector_store %arg6[%c0_23, %c0_24], %40 {strides = array<i32>} : memref<16x256xf32, #tpu.memory_space<vmem>>, vector<16x256xf32>,
    } else {
    }
    return
  }
  func.func @transform_0(%arg0: i32, %arg1: i32) -> (i32, i32) {
    %c0_i32 = arith.constant 0 : i32
    %c0_i32_0 = arith.constant 0 : i32
    return %c0_i32, %arg1 : i32, i32
  }
  func.func @transform_1(%arg0: i32, %arg1: i32) -> (i32, i32) {
    %c0_i32 = arith.constant 0 : i32
    return %arg1, %arg0 : i32, i32
  }
  func.func @transform_2(%arg0: i32, %arg1: i32) -> (i32, i32) {
    %c0_i32 = arith.constant 0 : i32
    %c0_i32_0 = arith.constant 0 : i32
    return %c0_i32, %arg0 : i32, i32
  }
  func.func @transform_3(%arg0: i32, %arg1: i32) -> (i32, i32) {
    %c0_i32 = arith.constant 0 : i32
    %c0_i32_0 = arith.constant 0 : i32
    return %c0_i32, %arg0 : i32, i32
  }
  func.func @transform_4(%arg0: i32, %arg1: i32) -> (i32, i32) {
    %c0_i32 = arith.constant 0 : i32
    %c0_i32_0 = arith.constant 0 : i32
    return %c0_i32, %arg0 : i32, i32
  }
}

</mosaic_0001>

<llo_original>
// kernel: tpu_custom_call.1
$region0: #{tpu_custom_call.1}
  #allocation0 [shape = 'u32[]', space=smem, size = 0x4, offset = 0x4, fixed_abs, tag = 'smem constant byte address 0x4 - core index']
  #allocation1 [shape = 'u32[144,128]{1,0:T(1,128)}', space=vmem, size = 0x12000, scoped, tag = 'internal scratch']
  #allocation2 [shape = 'f32[16,256]{1,0:T(8,128)}', space=vmem, size = 0x4000, scoped, tag = 'scratch operand']
  %s0 = inlined_call_operand.hbm [shape: f32[16,64], index: 0, kind: input, shape index: {}]
  %s1 = inlined_call_operand.hbm [shape: bf16[64,512], index: 1, kind: input, shape index: {}]
  %s2 = inlined_call_operand.vmem [shape: f32[1,512], index: 2, kind: input, shape index: {}]
  %s3 = inlined_call_operand.vmem [shape: f32[1,512], index: 3, kind: input, shape index: {}]
  %s4 = inlined_call_operand.hbm [shape: f32[16,512], index: 4, kind: output, shape index: {}]
  %s5 = sld [smem:[#allocation0]]
  $region65: #{tpu_custom_call.1} parent=0
    _
  %s7 = ssub.s32 1, %s5
  %s8 = scalar_select 0, %s7, %s5
  $region1: #{tpu_custom_call.1} parent=0
    #allocation3 [shape = 'u8[8192]{0}', space=vmem, size = 0x2000, scoped, tag = 'input window, operand 0, single buffered']
    #allocation4 [shape = 's32[2]{0}', space=sflag, size = 0x8, scoped, tag = 'scoped memory for tpu_custom_call.1']
    #allocation5 [shape = 's32[2]{0}', space=sflag, size = 0x8, scoped, tag = 'scoped memory for tpu_custom_call.1']
    #allocation6 [shape = 'u8[65536]{0}', space=vmem, size = 0x10000, scoped, tag = 'input window, operand 1']
    #allocation7 [shape = 's32[2]{0}', space=sflag, size = 0x8, scoped, tag = 'scoped memory for tpu_custom_call.1']
    #allocation8 [shape = 'u8[32768]{0}', space=vmem, size = 0x8000, scoped, tag = 'output window, operand 0']
    %9 = vsyncpa [#allocation4], 0
    %10 = vsyncpa [#allocation7], 0
    %s11 = scalar_lea.sflag [#allocation7], 1
    %12 = vsyncpa %s11, 0
    %13 = vsyncpa [#allocation5], 0
    %s14 = scalar_lea.sflag [#allocation5], 1
    %15 = vsyncpa %s14, 0
    loop: start=0, step=1, limit=4
    $region2: #{tpu_custom_call.1} parent=1 // loop_pre_header
      _
    $region3: #{tpu_custom_call.1} parent=1 // loop_header
      %s17 = sphi 0, %s21
      %p18 = scmp.ge.s32.totalorder %s17, 4
      %s24 = sphi 0, %s36
      %s25 = sphi 0, %s32
      %s26 = sphi 0, %s24
      %s27 = sphi 0, %s25
      %s28 = sphi 0, %s26
      %s29 = sphi 0, %s27
      %s39 = sphi 0, %s41
      %s42 = sphi 0, %s39
      %s43 = sphi 0, %s42
      %s59 = sphi 0, %s43
      %s67 = sphi 0, %s69
      %s70 = sphi 0, %s67
      %s71 = sphi 0, %s70
      %s87 = sphi 0, %s71
      %s93 = sphi 0, %s95
      %s96 = sphi 0, %s93
      %s97 = sphi 0, %s96
      %s113 = sphi 0, %s97
      %s119 = sphi 0, %s121
      %s122 = sphi 0, %s119
      %s123 = sphi 0, %s122
      %s139 = sphi 0, %s123
      %s145 = sphi 0, %s147
      %s148 = sphi 0, %s145
      %s149 = sphi 0, %s148
      %s165 = sphi 0, %s149
    $region4: #{tpu_custom_call.1} parent=1 // loop_header_branch
      %20 = sbr.rel (%p18) target = $region8
    $region5: #{tpu_custom_call.1} parent=1 // loop_body
      %s22 = ssub.s32 %s17, 1
      %s23 = ssub.s32 %s17, 2
      %s30 = sadd.s32 1, %s25
      %p31 = scmp.ge.s32.totalorder %s30, 1
      %s32 = scalar_select %p31, 0, %s30
      %s33 = sadd.s32 1, %s24
      %s34 = scalar_select %p31, %s33, %s24
      %p35 = scmp.ge.s32.totalorder %s34, 2
      %s36 = scalar_select %p35, 0, %s34
      %s37 = ssub.s32 %s25, %s32
      %p38 = scmp.eq.s32.totalorder %s37, 0
      %s40 = sadd.s32 %s39, 1
      %s41 = scalar_select %p38, %s39, %s40
      %p44 = pneg %p38
      %p45 = scmp.eq.s32.totalorder %s17, 1
      %p46 = por %p44, %p45
      %p47 = scmp.ne.s32.totalorder %s39, %s42
      %p48 = scmp.eq.s32.totalorder %s17, 0
      %p49 = por %p47, %p48
      %p50 = scmp.ne.s32.totalorder %s39, %s42
      %p51 = scmp.eq.s32.totalorder %s22, 1
      %p52 = por %p50, %p51
      %p53 = scmp.ne.s32.totalorder %s42, %s43
      %p54 = scmp.eq.s32.totalorder %s22, 0
      %p55 = por %p53, %p54
      %p56 = scmp.ne.s32.totalorder %s42, %s43
      %p57 = scmp.eq.s32.totalorder %s23, 1
      %p58 = por %p56, %p57
      %p60 = scmp.ne.s32.totalorder %s43, %s59
      %p61 = scmp.eq.s32.totalorder %s23, 0
      %p62 = por %p60, %p61
      %s63 = ssub.s32 %s25, %s32
      %s64 = ssub.s32 %s24, %s36
      %s65 = sor.u32 %s63, %s64
      %p66 = scmp.eq.s32.totalorder %s65, 0
      %s68 = sadd.s32 %s67, 1
      %s69 = scalar_select %p66, %s67, %s68
      %p72 = pneg %p66
      %p73 = scmp.eq.s32.totalorder %s17, 1
      %p74 = por %p72, %p73
      %p75 = scmp.ne.s32.totalorder %s67, %s70
      %p76 = scmp.eq.s32.totalorder %s17, 0
      %p77 = por %p75, %p76
      %p78 = scmp.ne.s32.totalorder %s67, %s70
      %p79 = scmp.eq.s32.totalorder %s22, 1
      %p80 = por %p78, %p79
      %p81 = scmp.ne.s32.totalorder %s70, %s71
      %p82 = scmp.eq.s32.totalorder %s22, 0
      %p83 = por %p81, %p82
      %p84 = scmp.ne.s32.totalorder %s70, %s71
      %p85 = scmp.eq.s32.totalorder %s23, 1
      %p86 = por %p84, %p85
      %p88 = scmp.ne.s32.totalorder %s71, %s87
      %p89 = scmp.eq.s32.totalorder %s23, 0
      %p90 = por %p88, %p89
      %s91 = ssub.s32 %s24, %s36
      %p92 = scmp.eq.s32.totalorder %s91, 0
      %s94 = sadd.s32 %s93, 1
      %s95 = scalar_select %p92, %s93, %s94
      %p98 = pneg %p92
      %p99 = scmp.eq.s32.totalorder %s17, 1
      %p100 = por %p98, %p99
      %p101 = scmp.ne.s32.totalorder %s93, %s96
      %p102 = scmp.eq.s32.totalorder %s17, 0
      %p103 = por %p101, %p102
      %p104 = scmp.ne.s32.totalorder %s93, %s96
      %p105 = scmp.eq.s32.totalorder %s22, 1
      %p106 = por %p104, %p105
      %p107 = scmp.ne.s32.totalorder %s96, %s97
      %p108 = scmp.eq.s32.totalorder %s22, 0
      %p109 = por %p107, %p108
      %p110 = scmp.ne.s32.totalorder %s96, %s97
      %p111 = scmp.eq.s32.totalorder %s23, 1
      %p112 = por %p110, %p111
      %p114 = scmp.ne.s32.totalorder %s97, %s113
      %p115 = scmp.eq.s32.totalorder %s23, 0
      %p116 = por %p114, %p115
      %s117 = ssub.s32 %s24, %s36
      %p118 = scmp.eq.s32.totalorder %s117, 0
      %s120 = sadd.s32 %s119, 1
      %s121 = scalar_select %p118, %s119, %s120
      %p124 = pneg %p118
      %p125 = scmp.eq.s32.totalorder %s17, 1
      %p126 = por %p124, %p125
      %p127 = scmp.ne.s32.totalorder %s119, %s122
      %p128 = scmp.eq.s32.totalorder %s17, 0
      %p129 = por %p127, %p128
      %p130 = scmp.ne.s32.totalorder %s119, %s122
      %p131 = scmp.eq.s32.totalorder %s22, 1
      %p132 = por %p130, %p131
      %p133 = scmp.ne.s32.totalorder %s122, %s123
      %p134 = scmp.eq.s32.totalorder %s22, 0
      %p135 = por %p133, %p134
      %p136 = scmp.ne.s32.totalorder %s122, %s123
      %p137 = scmp.eq.s32.totalorder %s23, 1
      %p138 = por %p136, %p137
      %p140 = scmp.ne.s32.totalorder %s123, %s139
      %p141 = scmp.eq.s32.totalorder %s23, 0
      %p142 = por %p140, %p141
      %s143 = ssub.s32 %s24, %s36
      %p144 = scmp.eq.s32.totalorder %s143, 0
      %s146 = sadd.s32 %s145, 1
      %s147 = scalar_select %p144, %s145, %s146
      %p150 = pneg %p144
      %p151 = scmp.eq.s32.totalorder %s17, 1
      %p152 = por %p150, %p151
      %p153 = scmp.ne.s32.totalorder %s145, %s148
      %p154 = scmp.eq.s32.totalorder %s17, 0
      %p155 = por %p153, %p154
      %p156 = scmp.ne.s32.totalorder %s145, %s148
      %p157 = scmp.eq.s32.totalorder %s22, 1
      %p158 = por %p156, %p157
      %p159 = scmp.ne.s32.totalorder %s148, %s149
      %p160 = scmp.eq.s32.totalorder %s22, 0
      %p161 = por %p159, %p160
      %p162 = scmp.ne.s32.totalorder %s148, %s149
      %p163 = scmp.eq.s32.totalorder %s23, 1
      %p164 = por %p162, %p163
      %p166 = scmp.ne.s32.totalorder %s149, %s165
      %p167 = scmp.eq.s32.totalorder %s23, 0
      %p168 = por %p166, %p167
      %p169 = scmp.le.s32.totalorder 1, %s17
      %p170 = scmp.lt.s32.totalorder %s17, 3
      %p171 = pnand %p169, %p170
      %p172 = pneg %p171
      // Predicated region
      $region9: #{tpu_custom_call.1} parent=5 // pred_check
        _
      $region10: #{tpu_custom_call.1} parent=5 // pred_check_branch
        %174 = sbr.rel (%p171) target = $region12
      $region11: #{tpu_custom_call.1} parent=5 // pred_region
        %s175 = ssub.s32 %s17, 1
        // Predicated region
        $region13: #{tpu_custom_call.1} parent=11 // pred_check
          %p176 = pneg %p55
        $region14: #{tpu_custom_call.1} parent=11 // pred_check_branch
          %178 = sbr.rel (%p176) target = $region16
        $region15: #{tpu_custom_call.1} parent=11 // pred_region
          %s180 = ssub.s32 256, 256
          %181 = vsyncadd [#allocation4], %s180
          %s182 = smul.addr %s27, 128
          %s183 = scalar_lea.hbm %s0, %s182
          %s184 = sshll.u32 [#allocation3], 4
          %s185 = int_to_ptr.vmem [resolvable:$true] %s184
          %190 = dma.hbm_to_vmem [thread:$0]  %s183, 256, %s185, [#allocation4], 128, 128, 8
        $region16: #{tpu_custom_call.1} parent=11 // pred_fallthru
          _
      $region12: #{tpu_custom_call.1} parent=5 // pred_fallthru
        _
      %p191 = scmp.lt.s32.totalorder %s17, 2
      // Predicated region
      $region17: #{tpu_custom_call.1} parent=5 // pred_check
        %p192 = pneg %p191
      $region18: #{tpu_custom_call.1} parent=5 // pred_check_branch
        %194 = sbr.rel (%p192) target = $region20
      $region19: #{tpu_custom_call.1} parent=5 // pred_region
        // Predicated region
        $region21: #{tpu_custom_call.1} parent=19 // pred_check
          %p195 = pneg %p77
        $region22: #{tpu_custom_call.1} parent=19 // pred_check_branch
          %197 = sbr.rel (%p195) target = $region24
        $region23: #{tpu_custom_call.1} parent=19 // pred_region
          %s198 = sand.u32 %s67, 1
          %s199 = scalar_lea.sflag [#allocation7], %s198
          %s200 = sand.u32 %s67, 1
          %s201 = smul.addr %s200, 64
          %s202 = scalar_lea.vmem [#allocation6], %s201
          %s203 = smul.u32 8, %s25
          %s204 = smul.u32 2, %s24
          %s206 = ssub.s32 1024, 1024
          %207 = vsyncadd %s199, %s206
          %s208 = smul.addr %s203, 4
          %s209 = sadd.s32 %s204, %s208
          %s210 = smul.addr %s209, 64
          %s211 = scalar_lea.hbm %s1, %s210
          %s212 = sshll.u32 %s202, 4
          %s213 = int_to_ptr.vmem [resolvable:$true] %s212
          %218 = dma.hbm_to_vmem [thread:$0]  %s211, 1024, %s213, %s199, 256, 128, 8
        $region24: #{tpu_custom_call.1} parent=19 // pred_fallthru
          _
        // Predicated region
        $region25: #{tpu_custom_call.1} parent=19 // pred_check
          %p219 = pneg %p103
        $region26: #{tpu_custom_call.1} parent=19 // pred_check_branch
          %221 = sbr.rel (%p219) target = $region28
        $region27: #{tpu_custom_call.1} parent=19 // pred_region
          %s222 = smul.u32 2, %s24
          %p223 = scmp.lt.s32.totalorder %s222, 3
          %s224 = scalar_select %p223, %s222, 3
          %s225 = scalar_lea.vmem %s2, %s224
          %s226 = smul.u32 2, %s24
        $region28: #{tpu_custom_call.1} parent=19 // pred_fallthru
          _
        // Predicated region
        $region29: #{tpu_custom_call.1} parent=19 // pred_check
          %p227 = pneg %p129
        $region30: #{tpu_custom_call.1} parent=19 // pred_check_branch
          %229 = sbr.rel (%p227) target = $region32
        $region31: #{tpu_custom_call.1} parent=19 // pred_region
          %s230 = smul.u32 2, %s24
          %p231 = scmp.lt.s32.totalorder %s230, 3
          %s232 = scalar_select %p231, %s230, 3
          %s233 = scalar_lea.vmem %s3, %s232
          %s234 = smul.u32 2, %s24
        $region32: #{tpu_custom_call.1} parent=19 // pred_fallthru
          _
      $region20: #{tpu_custom_call.1} parent=5 // pred_fallthru
        _
      %p235 = scmp.le.s32.totalorder 1, %s17
      %p236 = scmp.lt.s32.totalorder %s17, 3
      %p237 = pnand %p235, %p236
      %p238 = pneg %p237
      // Predicated region
      $region33: #{tpu_custom_call.1} parent=5 // pred_check
        _
      $region34: #{tpu_custom_call.1} parent=5 // pred_check_branch
        %240 = sbr.rel (%p237) target = $region36
      $region35: #{tpu_custom_call.1} parent=5 // pred_region
        %s241 = ssub.s32 %s17, 1
        // Predicated region
        $region37: #{tpu_custom_call.1} parent=35 // pred_check
          %p242 = pneg %p55
        $region38: #{tpu_custom_call.1} parent=35 // pred_check_branch
          %244 = sbr.rel (%p242) target = $region40
        $region39: #{tpu_custom_call.1} parent=35 // pred_region
          %245 = dma.done [#allocation4], 256
        $region40: #{tpu_custom_call.1} parent=35 // pred_fallthru
          _
        %s246 = sand.u32 %s70, 1
        %s247 = scalar_lea.sflag [#allocation7], %s246
        %s248 = sand.u32 %s70, 1
        %s249 = smul.addr %s248, 64
        %s250 = scalar_lea.vmem [#allocation6], %s249
        // Predicated region
        $region41: #{tpu_custom_call.1} parent=35 // pred_check
          %p251 = pneg %p83
        $region42: #{tpu_custom_call.1} parent=35 // pred_check_branch
          %253 = sbr.rel (%p251) target = $region44
        $region43: #{tpu_custom_call.1} parent=35 // pred_region
          %254 = dma.done %s247, 1024
        $region44: #{tpu_custom_call.1} parent=35 // pred_fallthru
          _
        %p255 = pneg %p55
        %p256 = pneg %p52
        %s257 = sand.u32 %s70, 1
        %s258 = scalar_lea.sflag [#allocation7], %s257
        %s259 = sand.u32 %s70, 1
        %s260 = smul.addr %s259, 64
        %s261 = scalar_lea.vmem [#allocation6], %s260
        %p262 = pneg %p83
        %p263 = pneg %p80
        %s264 = smul.u32 2, %s26
        %p265 = scmp.lt.s32.totalorder %s264, 3
        %s266 = scalar_select %p265, %s264, 3
        %s267 = scalar_lea.vmem %s2, %s266
        %p268 = pneg %p109
        %p269 = pneg %p106
        %s270 = smul.u32 2, %s26
        %p271 = scmp.lt.s32.totalorder %s270, 3
        %s272 = scalar_select %p271, %s270, 3
        %s273 = scalar_lea.vmem %s3, %s272
        %p274 = pneg %p135
        %p275 = pneg %p132
        %p276 = pneg %p161
        %p277 = pneg %p158
        %s278 = sand.u32 %s148, 1
        %s279 = scalar_lea.sflag [#allocation5], %s278
        %s280 = sand.u32 %s148, 1
        %s281 = smul.addr %s280, 32
        %s282 = scalar_lea.vmem [#allocation8], %s281
        %s283 = smul.u32 8, %s27
        %s284 = smul.u32 2, %s26
        %s285 = smul.u32 2, %s26
        %p286 = scmp.lt.s32.totalorder %s285, 3
        %s287 = scalar_select %p286, %s285, 3
        %s288 = scalar_lea.vmem %s2, %s287
        %s289 = smul.u32 2, %s26
        %s290 = smul.u32 2, %s26
        %p291 = scmp.lt.s32.totalorder %s290, 3
        %s292 = scalar_select %p291, %s290, 3
        %s293 = scalar_lea.vmem %s3, %s292
        %s294 = smul.u32 2, %s26
        %s295 = smul.u32 2, %s26
        %p297 = scmp.eq.s32.totalorder %s27, 0
        // Predicated region
        $region45: #{tpu_custom_call.1} parent=35 // pred_check
          %p298 = pneg %p297
        $region46: #{tpu_custom_call.1} parent=35 // pred_check_branch
          %300 = sbr.rel (%p298) target = $region48
        $region47: #{tpu_custom_call.1} parent=35 // pred_region
          %301 = vst [vmem:[#allocation2] sm:$0xff] 0.0
          %302 = vst [vmem:[#allocation2 + $0x8] sm:$0xff] 0.0
          %303 = vst [vmem:[#allocation2 + $0x10] sm:$0xff] 0.0
          %304 = vst [vmem:[#allocation2 + $0x18] sm:$0xff] 0.0
        $region48: #{tpu_custom_call.1} parent=35 // pred_fallthru
          _
        %v305 = vld [vmem:[#allocation2] sm:$0xff]
        %v306 = vld [vmem:[#allocation2 + $0x8] sm:$0xff]
        %v307 = vld [vmem:[#allocation2 + $0x10] sm:$0xff]
        %v308 = vld [vmem:[#allocation2 + $0x18] sm:$0xff]
        %v309 = vld [vmem:[#allocation3] sm:$0xff]
        %v310 = vld [vmem:[#allocation3 + $0x8] sm:$0xff]
        %v311 = vpack.c.bf16 %v310, %v309
        %v312 = vld [vmem:[%s250] sm:$0xff]
        %v313 = vld [vmem:[%s250 + $0x8] sm:$0xff]
        %v314 = vld [vmem:[%s250 + $0x10] sm:$0xff]
        %v315 = vld [vmem:[%s250 + $0x18] sm:$0xff]
        %v316 = vld [vmem:[%s250 + $0x20] sm:$0xff]
        %v317 = vld [vmem:[%s250 + $0x28] sm:$0xff]
        %v318 = vld [vmem:[%s250 + $0x30] sm:$0xff]
        %v319 = vld [vmem:[%s250 + $0x38] sm:$0xff]
        %v328 = vunpack.c.l.b16 %v312
        %v329 = vunpack.c.h.b16 %v312
        %v330 = vunpack.c.l.b16 %v313
        %v331 = vunpack.c.h.b16 %v313
        %v332 = vunpack.c.l.b16 %v314
        %v333 = vunpack.c.h.b16 %v314
        %v334 = vunpack.c.l.b16 %v315
        %v335 = vunpack.c.h.b16 %v315
        %v336 = vunpack.c.l.b16 %v316
        %v337 = vunpack.c.h.b16 %v316
        %v338 = vunpack.c.l.b16 %v317
        %v339 = vunpack.c.h.b16 %v317
        %v340 = vunpack.c.l.b16 %v318
        %v341 = vunpack.c.h.b16 %v318
        %v342 = vunpack.c.l.b16 %v319
        %v343 = vunpack.c.h.b16 %v319
        %v344 = vpack.c.b16 %v330, %v328
        %v345 = vpack.c.b16 %v331, %v329
        %v346 = vpack.c.b16 %v334, %v332
        %v347 = vpack.c.b16 %v335, %v333
        %v348 = vpack.c.b16 %v338, %v336
        %v349 = vpack.c.b16 %v339, %v337
        %v350 = vpack.c.b16 %v342, %v340
        %v351 = vpack.c.b16 %v343, %v341
        %vm360 = vcmask 523264
        %v362 = vsel %vm360, %v311, 0
        %364 = vmatprep.subr.bf16.mxu0 %v345
        %365 = vmatpush1.bf16.msra.mxu0 %v344
        %366 = vmatprep.subr.bf16.mxu0 %v347
        %367 = vmatpush1.bf16.msra.mxu0 %v346
        %368 = vmatprep.subr.bf16.mxu0 %v349
        %369 = vmatpush1.bf16.msra.mxu0 %v348
        %370 = vmatprep.subr.bf16.mxu0 %v351
        %371 = vmatpush1.bf16.msra.mxu0 %v350
        %372 = vmatprep.subr.bf16.mxu0 0
        %373 = vmatpush1.bf16.msra.mxu0 0
        %374 = vmatprep.subr.bf16.mxu0 0
        %375 = vmatpush1.bf16.msra.mxu0 0
        %376 = vmatprep.subr.bf16.mxu0 0
        %377 = vmatpush1.bf16.msra.mxu0 0
        %378 = vmatprep.subr.bf16.mxu0 0
        %379 = vmatpush1.bf16.msra.mxu0 0
        %380 = vmatprep.subr.bf16.mxu0 0
        %381 = vmatpush1.bf16.msra.mxu0 0
        %382 = vmatprep.subr.bf16.mxu0 0
        %383 = vmatpush1.bf16.msra.mxu0 0
        %384 = vmatprep.subr.bf16.mxu0 0
        %385 = vmatpush1.bf16.msra.mxu0 0
        %386 = vmatprep.subr.bf16.mxu0 0
        %387 = vmatpush1.bf16.msra.mxu0 0
        %388 = vmatprep.subr.bf16.mxu0 0
        %389 = vmatpush1.bf16.msra.mxu0 0
        %390 = vmatprep.subr.bf16.mxu0 0
        %391 = vmatpush1.bf16.msra.mxu0 0
        %392 = vmatprep.subr.bf16.mxu0 0
        %393 = vmatpush1.bf16.msra.mxu0 0
        %394 = vmatprep.subr.bf16.mxu0 0
        %395 = vmatpush1.bf16.msra.mxu0 0
        %396 = vmatprep.mubr.bf16.mxu0 0
        %397 = vmatmul.mubr.bf16.gmra.mrb[0].mxu0 %v362
        %v398 = vpop.f32.mrb[0].mxu0
        %v399 = vadd.f32 0.0, %v398
        %v400 = vpop.f32.mrb[0].mxu0
        %v401 = vadd.f32 0.0, %v400
        %v402 = vpop.f32.mrb[0].mxu0
        %v403 = vadd.f32 0.0, %v402
        %v404 = vpop.f32.mrb[0].mxu0
        %v405 = vadd.f32 0.0, %v404
        %406 = vdwg.mxu0
        %v407 = vadd.f32 %v305, %v399
        %v408 = vadd.f32 %v306, %v401
        %v409 = vadd.f32 %v307, %v403
        %v410 = vadd.f32 %v308, %v405
        %411 = vst [vmem:[#allocation2] sm:$0xff] %v407
        %412 = vst [vmem:[#allocation2 + $0x8] sm:$0xff] %v408
        %413 = vst [vmem:[#allocation2 + $0x10] sm:$0xff] %v409
        %414 = vst [vmem:[#allocation2 + $0x18] sm:$0xff] %v410
        // Predicated region
        $region49: #{tpu_custom_call.1} parent=35 // pred_check
          %p415 = pneg %p297
        $region50: #{tpu_custom_call.1} parent=35 // pred_check_branch
          %417 = sbr.rel (%p415) target = $region52
        $region51: #{tpu_custom_call.1} parent=35 // pred_region
          %v418 = vld [vmem:[#allocation2] sm:$0xff]
          %v419 = vld [vmem:[#allocation2 + $0x8] sm:$0xff]
          %v420 = vld [vmem:[#allocation2 + $0x10] sm:$0xff]
          %v421 = vld [vmem:[#allocation2 + $0x18] sm:$0xff]
          %v422 = vadd.f32 %v418, %v420
          %v423 = vrot.slane %v422, 4
          %v424 = vadd.f32 %v422, %v423
          %v425 = vrot.slane %v424, 2
          %v426 = vadd.f32 %v424, %v425
          %v427 = vrot.slane %v426, 1
          %v428 = vadd.f32 %v426, %v427
          %v429 = vadd.f32 %v419, %v421
          %v430 = vrot.slane %v429, 4
          %v431 = vadd.f32 %v429, %v430
          %v432 = vrot.slane %v431, 2
          %v433 = vadd.f32 %v431, %v432
          %v434 = vrot.slane %v433, 1
          %v435 = vadd.f32 %v433, %v434
          %v436 = vrcp.pop 16.0
          %v437 = vmul.f32 %v428, %v436
          %v438 = vmul.f32 %v435, %v436
          %v439 = vmul.f32 %v418, %v418
          %v440 = vmul.f32 %v419, %v419
          %v441 = vmul.f32 %v420, %v420
          %v442 = vmul.f32 %v421, %v421
          %v443 = vadd.f32 %v439, %v441
          %v444 = vrot.slane %v443, 4
          %v445 = vadd.f32 %v443, %v444
          %v446 = vrot.slane %v445, 2
          %v447 = vadd.f32 %v445, %v446
          %v448 = vrot.slane %v447, 1
          %v449 = vadd.f32 %v447, %v448
          %v450 = vadd.f32 %v440, %v442
          %v451 = vrot.slane %v450, 4
          %v452 = vadd.f32 %v450, %v451
          %v453 = vrot.slane %v452, 2
          %v454 = vadd.f32 %v452, %v453
          %v455 = vrot.slane %v454, 1
          %v456 = vadd.f32 %v454, %v455
          %v457 = vmul.f32 %v449, %v436
          %v458 = vmul.f32 %v456, %v436
          %v459 = vmul.f32 %v437, %v437
          %v460 = vmul.f32 %v438, %v438
          %v461 = vsub.f32 %v457, %v459
          %v462 = vsub.f32 %v458, %v460
          %v463 = vmax.f32 %v461, 0.0
          %v464 = vmax.f32 %v462, 0.0
          %v465 = vld [vmem:[%s288] sm:$0x3]
          %v466 = vadd.f32 %v463, 1e-05
          %v467 = vadd.f32 %v464, 1e-05
          %v468 = vrsqrt.pop %v466
          %v469 = vrsqrt.pop %v467
          %v472 = vcombine.low %v468, %v469
          %v474 = vunpack.c.l.s4 1966171168
          %v475 = vunpack.c.0.s8 %v474
          %v476 = vlaneseq
          %v477 = vshrl.u32 %v476, 7
          %v478 = vsub.s32 %v475, %v477
          %v479 = vrot.slane %v472, %v478
          %v481 = vunpack.c.l.s4 1966171168
          %v482 = vunpack.c.0.s8 %v481
          %v483 = vlaneseq
          %v484 = vshrl.u32 %v483, 7
          %v485 = vsub.s32 %v482, %v484
          %v486 = vrot.slane %v479, %v485
          %v488 = vmul.f32 %v465, %v486
          %v489 = vld [vmem:[%s293] sm:$0x3]
          %v491 = vlaneseq
          %v492 = vshrl.u32 %v491, 7
          %v493 = vsub.s32 0, %v492
          %v494 = vrot.slane %v488, %v493
          %v495 = vlaneseq
          %v496 = vshrl.u32 %v495, 7
          %v497 = vsub.s32 1, %v496
          %v498 = vrot.slane %v488, %v497
          %v501 = vmul.f32 %v437, %v494
          %v502 = vmul.f32 %v438, %v498
          %v505 = vcombine.low %v501, %v502
          %v507 = vunpack.c.l.s4 1966171168
          %v508 = vunpack.c.0.s8 %v507
          %v509 = vlaneseq
          %v510 = vshrl.u32 %v509, 7
          %v511 = vsub.s32 %v508, %v510
          %v512 = vrot.slane %v505, %v511
          %v514 = vunpack.c.l.s4 1966171168
          %v515 = vunpack.c.0.s8 %v514
          %v516 = vlaneseq
          %v517 = vshrl.u32 %v516, 7
          %v518 = vsub.s32 %v515, %v517
          %v519 = vrot.slane %v512, %v518
          %v521 = vsub.f32 %v489, %v519
          %v522 = vmul.f32 %v418, %v494
          %v523 = vmul.f32 %v419, %v498
          %v524 = vmul.f32 %v420, %v494
          %v525 = vmul.f32 %v421, %v498
          %v527 = vlaneseq
          %v528 = vshrl.u32 %v527, 7
          %v529 = vsub.s32 0, %v528
          %v530 = vrot.slane %v521, %v529
          %v531 = vlaneseq
          %v532 = vshrl.u32 %v531, 7
          %v533 = vsub.s32 1, %v532
          %v534 = vrot.slane %v521, %v533
          %v537 = vadd.f32 %v522, %v530
          %v538 = vadd.f32 %v523, %v534
          %v539 = vadd.f32 %v524, %v530
          %v540 = vadd.f32 %v525, %v534
          %v541 = vmax.f32 %v537, 0.0
          %v542 = vmax.f32 %v538, 0.0
          %v543 = vmax.f32 %v539, 0.0
          %v544 = vmax.f32 %v540, 0.0
          %545 = vst [vmem:[%s282] sm:$0xff] %v541
          %546 = vst [vmem:[%s282 + $0x8] sm:$0xff] %v542
          %547 = vst [vmem:[%s282 + $0x10] sm:$0xff] %v543
          %548 = vst [vmem:[%s282 + $0x18] sm:$0xff] %v544
        $region52: #{tpu_custom_call.1} parent=35 // pred_fallthru
          _
        %s549 = sand.u32 %s148, 1
        %s550 = scalar_lea.sflag [#allocation5], %s549
        %s551 = sand.u32 %s148, 1
        %s552 = smul.addr %s551, 32
        %s553 = scalar_lea.vmem [#allocation8], %s552
        // Predicated region
        $region53: #{tpu_custom_call.1} parent=35 // pred_check
          %p554 = pneg %p158
        $region54: #{tpu_custom_call.1} parent=35 // pred_check_branch
          %556 = sbr.rel (%p554) target = $region56
        $region55: #{tpu_custom_call.1} parent=35 // pred_region
          %s557 = smul.u32 2, %s26
          %s559 = ssub.s32 512, 512
          %560 = vsyncadd %s550, %s559
          %s561 = smul.addr %s557, 128
          %s562 = scalar_lea.hbm %s4, %s561
          %s563 = sshll.u32 %s553, 4
          %s564 = int_to_ptr.vmem [resolvable:$true] %s563
          %569 = dma.vmem_to_hbm [thread:$0]  %s564, 512, %s562, %s550, 256, 512, 16
        $region56: #{tpu_custom_call.1} parent=35 // pred_fallthru
          _
      $region36: #{tpu_custom_call.1} parent=5 // pred_fallthru
        _
      %p570 = scmp.le.s32.totalorder 2, %s17
      // Predicated region
      $region57: #{tpu_custom_call.1} parent=5 // pred_check
        %p571 = pneg %p570
      $region58: #{tpu_custom_call.1} parent=5 // pred_check_branch
        %573 = sbr.rel (%p571) target = $region60
      $region59: #{tpu_custom_call.1} parent=5 // pred_region
        %s574 = ssub.s32 %s17, 2
        // Predicated region
        $region61: #{tpu_custom_call.1} parent=59 // pred_check
          %p575 = pneg %p164
        $region62: #{tpu_custom_call.1} parent=59 // pred_check_branch
          %577 = sbr.rel (%p575) target = $region64
        $region63: #{tpu_custom_call.1} parent=59 // pred_region
          %s578 = sand.u32 %s149, 1
          %s579 = scalar_lea.sflag [#allocation5], %s578
          %s580 = sand.u32 %s149, 1
          %s581 = smul.addr %s580, 32
          %s582 = scalar_lea.vmem [#allocation8], %s581
          %583 = dma.done %s579, 512
        $region64: #{tpu_custom_call.1} parent=59 // pred_fallthru
          _
      $region60: #{tpu_custom_call.1} parent=5 // pred_fallthru
        _
    $region6: #{tpu_custom_call.1} parent=1 // loop_footer
      %s21 = sadd.s32 1, %s17
    $region7: #{tpu_custom_call.1} parent=1 // loop_footer_branch
      %16 = sbr.rel target = $region3
    $region8: #{tpu_custom_call.1} parent=1 // loop_exit
      _
    %584 = vsyncpa [#allocation4], 1
    %s585 = scalar_lea.sflag [#allocation4], 1
    %586 = vsyncpa %s585, 1
    %587 = vsyncpa [#allocation7], 1
    %s588 = scalar_lea.sflag [#allocation7], 1
    %589 = vsyncpa %s588, 1
    %590 = vsyncpa [#allocation5], 1
    %s591 = scalar_lea.sflag [#allocation5], 1
    %592 = vsyncpa %s591, 1

</llo_original>
